<compile_context>
chip_gen: v5e
topology: v5e:2x2
jax: 0.10.0
libtpu: 0.0.40
codegen_flags: <defaults>
</compile_context>

<pallas_src>
import jax
import jax.numpy as jnp
from jax import lax
from jax.experimental import pallas as pl
from jax.experimental.pallas import tpu as pltpu

_THRESH = 0.05
_EPS = 1e-20


def _cdiv(a, b):
    return -(-a // b)


def _round_up(x, m):
    return _cdiv(x, m) * m


def _make_acc_kernel(C, P):
    def kernel(pred_ref, gt_ref, mask_ref, cnt_ref, msum_ref):
        s = pl.program_id(0)          # parallel P-split index
        j = pl.program_id(2)          # reduction step within this split

        @pl.when(j == 0)
        def _():
            cnt_ref[...] = jnp.zeros_like(cnt_ref)
            msum_ref[...] = jnp.zeros_like(msum_ref)

        n_tile, p_tile = mask_ref.shape

        # Global (unclamped) P-block index. Duplicated (clamped in the index
        # map) and ragged-edge blocks are gated out by this column predicate.
        pb = s * pl.num_programs(2) + j
        col = pb * p_tile + lax.broadcasted_iota(jnp.int32, (n_tile, p_tile), 1)
        col_ok = col < P

        mask_raw = mask_ref[...]
        # where(), not multiply: out-of-range columns may hold stale/NaN VMEM.
        mask_f = jnp.where(col_ok, mask_raw.astype(jnp.float32), 0.0)

        # Unrolled channel reduction (C small & static) on dense (n_tile, p_tile)
        # vregs; inputs are upcast per-slice so bf16 flow tensors also work.
        err2 = jnp.zeros((n_tile, p_tile), jnp.float32)
        gt2 = jnp.zeros((n_tile, p_tile), jnp.float32)
        for c in range(C):
            p = pred_ref[:, c, :].astype(jnp.float32)
            g = gt_ref[:, c, :].astype(jnp.float32)
            d = p - g
            err2 = err2 + d * d
            gt2 = gt2 + g * g

        # abs_ok | rel_ok  <=>  err2 + eps <= t^2 * max(1, gt2 + eps)   (exact)
        thr2 = _THRESH * _THRESH
        ok = (err2 + _EPS) <= thr2 * jnp.maximum(1.0, gt2 + _EPS)
        ok = ok & (mask_raw != 0) & col_ok

        # Output blocks are resident across j (their block index only depends
        # on (s, i)), so accumulate directly -- no scratch, no epilogue copy.
        cnt_ref[...] += jnp.sum(ok.astype(jnp.float32), axis=-1, keepdims=True)
        msum_ref[...] += jnp.sum(mask_f, axis=-1, keepdims=True)

    return kernel


def acc_005(flow_pred, flow_gt, mask, *, n_tile_max=64, max_p_tile=4096):
    """flow_pred, flow_gt: (N, C, *) float; mask: (N, *) float/bool. Returns scalar acc1."""
    N, C = flow_pred.shape[:2]
    flow_pred = flow_pred.reshape(N, C, -1)
    flow_gt = flow_gt.reshape(N, C, -1)
    P = flow_pred.shape[-1]
    mask = mask.reshape(N, P)

    # Keep flow in any supported float dtype (bf16 halves its HBM traffic).
    if flow_pred.dtype not in (jnp.float32, jnp.bfloat16, jnp.float16):
        flow_pred = flow_pred.astype(jnp.float32)
    if flow_gt.dtype not in (jnp.float32, jnp.bfloat16, jnp.float16):
        flow_gt = flow_gt.astype(jnp.float32)
    if mask.dtype not in (jnp.float32, jnp.bfloat16, jnp.float16, jnp.int32):
        mask = mask.astype(jnp.float32)   # bool / int8 / f64 fallback

    # --- N tiling -------------------------------------------------------------
    n_tile = min(n_tile_max, N)
    if n_tile < N and n_tile % 8 != 0:
        n_tile = _round_up(n_tile, 8)
    # Narrow mask dtypes need more sublanes per tile; fall back to f32 if not met.
    m_isz = jnp.dtype(mask.dtype).itemsize
    if m_isz == 2 and not (n_tile == N or n_tile % 16 == 0):
        mask = mask.astype(jnp.float32)
        m_isz = 4

    # --- P tiling (multiple of 128; balanced so the last block wastes <128 cols)
    p128 = _round_up(P, 128)
    p_tile = _round_up(_cdiv(p128, _cdiv(p128, max_p_tile)), 128)

    flow_isz = jnp.dtype(flow_pred.dtype).itemsize

    def _vmem_bytes(nt, pt):
        # (C, p_tile) minor plane pads C up to the native sublane tile height.
        c_sub = _round_up(C, 8 * (4 // flow_isz))
        flow_tile = nt * c_sub * pt * flow_isz
        mask_tile = _round_up(nt, 8) * pt * m_isz
        return 2 * (2 * flow_tile + mask_tile)       # double-buffered

    budget = 44 * 1024 * 1024                        # leaves headroom on v7x (64 MiB)
    while _vmem_bytes(n_tile, p_tile) > budget and p_tile > 512:
        p_tile = max(512, _round_up(p_tile // 2, 128))
    while _vmem_bytes(n_tile, p_tile) > budget and n_tile > 8:
        n_tile = max(8, n_tile // 2)

    grid_n = _cdiv(N, n_tile)
    grid_p = _cdiv(P, p_tile)

    # Guarantee >=2 steps on a parallel axis for v7x megacore: if N gives only
    # one block, split the P reduction in two and sum the partials in JAX.
    n_splits = 2 if (grid_n == 1 and grid_p >= 2) else 1
    p_per_split = _cdiv(grid_p, n_splits)

    def flow_map(s, i, j):
        pb = jnp.minimum(s * p_per_split + j, grid_p - 1)  # clamp: never OOB DMA
        return (i, 0, pb)

    def mask_map(s, i, j):
        pb = jnp.minimum(s * p_per_split + j, grid_p - 1)
        return (i, pb)

    def out_map(s, i, j):
        return (s, i, 0)

    n_out = grid_n * n_tile
    in_bytes = ((flow_pred.size + flow_gt.size) * flow_isz + mask.size * m_isz)
    cost = pl.CostEstimate(
        flops=(6 * C + 10) * N * P,
        transcendentals=0,
        bytes_accessed=in_bytes + 2 * n_splits * n_out * 4,
    )

    kernel = _make_acc_kernel(C, P)

    cnt_parts, msum_parts = pl.pallas_call(
        kernel,
        out_shape=(
            jax.ShapeDtypeStruct((n_splits, n_out, 1), jnp.float32),
            jax.ShapeDtypeStruct((n_splits, n_out, 1), jnp.float32),
        ),
        grid_spec=pltpu.PrefetchScalarGridSpec(
            num_scalar_prefetch=0,
            grid=(n_splits, grid_n, p_per_split),
            in_specs=[
                pl.BlockSpec((n_tile, C, p_tile), flow_map),
                pl.BlockSpec((n_tile, C, p_tile), flow_map),
                pl.BlockSpec((n_tile, p_tile), mask_map),
            ],
            out_specs=(
                pl.BlockSpec((None, n_tile, 1), out_map),
                pl.BlockSpec((None, n_tile, 1), out_map),
            ),
        ),
        compiler_params=pltpu.CompilerParams(
            # (P-split, N) independent -> megacore-shardable; innermost P axis
            # is the reduction. 48 MiB scoped VMEM fits v7x (64 MiB physical)
            # and is plenty on v5e/v6e (128 MiB) for the <=~44 MiB tiles above.
            dimension_semantics=("parallel", "parallel", "arbitrary"),
            vmem_limit_bytes=48 * 1024 * 1024,
        ),
        cost_estimate=cost,
    )(flow_pred, flow_gt, mask)

    cnt = jnp.sum(cnt_parts[:, :N, 0], axis=0)
    msum = jnp.sum(msum_parts[:, :N, 0], axis=0)
    valid = msum > 0.0
    per_batch = jnp.where(valid, cnt / jnp.where(valid, msum, 1.0), 0.0)
    # TODO(synk): numpy reference yields NaN when no batch has mask_sum > 0;
    # here we return 0.0 for that degenerate case instead.
    acc1 = jnp.sum(per_batch) / jnp.maximum(jnp.sum(valid.astype(jnp.float32)), 1.0)
    return acc1


def _ref_acc(pred, gt, m):
    err = jnp.sqrt(jnp.sum((pred - gt) ** 2, axis=1) + 1e-20)
    gtl = jnp.sqrt(jnp.sum(gt * gt, axis=1) + 1e-20)
    mm = m != 0
    ok = ((err <= 0.05) & mm) | (((err / gtl) <= 0.05) & mm)
    cnt = jnp.sum(ok, axis=1).astype(jnp.float32)
    ms = jnp.sum(m, axis=1)
    valid = ms > 0
    per = jnp.where(valid, cnt / jnp.where(valid, ms, 1.0), 0.0)
    return jnp.sum(per) / jnp.maximum(jnp.sum(valid.astype(jnp.float32)), 1.0)


if __name__ == "__main__":
    key = jax.random.PRNGKey(0)
    k1, k2, k3, k4, k5, k6 = jax.random.split(key, 6)

    N, C, P = 2, 3, 300  # batch, flow channels, points (P deliberately not 128-aligned)
    flow_gt = jax.random.normal(k1, (N, C, P), dtype=jnp.float32) * 0.1
    # predictions close to gt so a nontrivial fraction pass the 0.05 threshold
    flow_pred = flow_gt + jax.random.normal(k2, (N, C, P), dtype=jnp.float32) * 0.05
    mask = (jax.random.uniform(k3, (N, P)) > 0.3).astype(jnp.float32)

    ref = _ref_acc(flow_pred, flow_gt, mask)

    # Default config (single P block, no split).
    acc1 = acc_005(flow_pred, flow_gt, mask)
    jax.block_until_ready(acc1)
    assert abs(float(acc1) - float(ref)) < 1e-5, (float(acc1), float(ref))

    # Small tiles: multiple P blocks, megacore P-split, ragged P edge and a
    # gated duplicate block (exercises the in-kernel column predicate).
    acc1_b = acc_005(flow_pred, flow_gt, mask, n_tile_max=8, max_p_tile=128)
    jax.block_until_ready(acc1_b)
    assert abs(float(acc1_b) - float(ref)) < 1e-5, (float(acc1_b), float(ref))

    # Ragged N: grid_n > 1 with a partial last N block.
    N2 = 10
    gt2 = jax.random.normal(k4, (N2, C, P), dtype=jnp.float32) * 0.1
    pr2 = gt2 + jax.random.normal(k5, (N2, C, P), dtype=jnp.float32) * 0.05
    m2 = (jax.random.uniform(k6, (N2, P)) > 0.3).astype(jnp.float32)
    ref2 = _ref_acc(pr2, gt2, m2)
    acc2 = acc_005(pr2, gt2, m2, n_tile_max=8, max_p_tile=128)
    jax.block_until_ready(acc2)
    assert abs(float(acc2) - float(ref2)) < 1e-5, (float(acc2), float(ref2))

    print("KERNEL_OK")
</pallas_src>

<mosaic_0001>
module attributes {stable_mosaic.version = 11 : i64} {
  func.func @kernel(%arg0: i32, %arg1: i32, %arg2: i32, %arg3: memref<2x3x384xf32, #tpu.memory_space<vmem>>, %arg4: memref<2x3x384xf32, #tpu.memory_space<vmem>>, %arg5: memref<2x384xf32, #tpu.memory_space<vmem>>, %arg6: memref<1x2x1xf32, #tpu.memory_space<vmem>>, %arg7: memref<1x2x1xf32, #tpu.memory_space<vmem>>) attributes {dimension_semantics = [#tpu.dimension_semantics<parallel>, #tpu.dimension_semantics<parallel>, #tpu.dimension_semantics<arbitrary>], iteration_bounds = array<i64: 1, 1, 1>, scalar_prefetch = 0 : i64, scratch_operands = 0 : i64, tpu.core_type = #tpu.core_type<tc>, window_params = [{transform_indices = @transform_0, window_bounds = array<i64: 2, 3, 384>}, {transform_indices = @transform_1, window_bounds = array<i64: 2, 3, 384>}, {transform_indices = @transform_2, window_bounds = array<i64: 2, 384>}, {transform_indices = @transform_3, window_bounds = array<i64: 1, 2, 1>}, {transform_indices = @transform_4, window_bounds = array<i64: 1, 2, 1>}]} {
    %c0_i32 = arith.constant 0 : i32
    %0 = arith.cmpi eq, %arg2, %c0_i32 : i32
    %1 = arith.extui %0 : i1 to i32
    %c0_i32_0 = arith.constant 0 : i32
    %2 = arith.cmpi ne, %1, %c0_i32_0 : i32
    scf.if %2 {
      %cst_39 = arith.constant 0.000000e+00 : f32
      %74 = vector.broadcast %cst_39 : f32 to vector<2x1xf32>
      %c0_40 = arith.constant 0 : index
      %c0_41 = arith.constant 0 : index
      %c0_42 = arith.constant 0 : index
      %75 = vector.load %arg6[%c0_40, %c0_41, %c0_42] : memref<1x2x1xf32, #tpu.memory_space<vmem>>, vector<1x2x1xf32>
      %76 = vector.shape_cast %75 : vector<1x2x1xf32> to vector<2x1xf32>
      %77 = vector.shape_cast %74 : vector<2x1xf32> to vector<1x2x1xf32>
      tpu.vector_store %arg6[%c0_40, %c0_41, %c0_42], %77 {strides = array<i32>} : memref<1x2x1xf32, #tpu.memory_space<vmem>>, vector<1x2x1xf32>,
      %cst_43 = arith.constant 0.000000e+00 : f32
      %78 = vector.broadcast %cst_43 : f32 to vector<2x1xf32>
      %c0_44 = arith.constant 0 : index
      %c0_45 = arith.constant 0 : index
      %c0_46 = arith.constant 0 : index
      %79 = vector.load %arg7[%c0_44, %c0_45, %c0_46] : memref<1x2x1xf32, #tpu.memory_space<vmem>>, vector<1x2x1xf32>
      %80 = vector.shape_cast %79 : vector<1x2x1xf32> to vector<2x1xf32>
      %81 = vector.shape_cast %78 : vector<2x1xf32> to vector<1x2x1xf32>
      tpu.vector_store %arg7[%c0_44, %c0_45, %c0_46], %81 {strides = array<i32>} : memref<1x2x1xf32, #tpu.memory_space<vmem>>, vector<1x2x1xf32>,
    } else {
    }
    %c1_i32 = arith.constant 1 : i32
    %3 = arith.muli %arg0, %c1_i32 : i32
    %4 = arith.addi %3, %arg2 : i32
    %c384_i32 = arith.constant 384 : i32
    %5 = arith.muli %4, %c384_i32 : i32
    %6 = tpu.iota {dimensions = array<i32: 1>} : vector<2x384xi32>
    %7 = vector.broadcast %5 : i32 to vector<2x384xi32>
    %8 = arith.addi %7, %6 : vector<2x384xi32>
    %c300_i32 = arith.constant 300 : i32
    %9 = vector.broadcast %c300_i32 : i32 to vector<2x384xi32>
    %10 = arith.cmpi slt, %8, %9 : vector<2x384xi32>
    %c0 = arith.constant 0 : index
    %c0_1 = arith.constant 0 : index
    %11 = vector.load %arg5[%c0, %c0_1] : memref<2x384xf32, #tpu.memory_space<vmem>>, vector<2x384xf32>
    %cst = arith.constant 0.000000e+00 : f32
    %12 = vector.broadcast %cst : f32 to vector<2x384xf32>
    %13 = arith.select %10, %11, %12 : vector<2x384xi1>, vector<2x384xf32>
    %cst_2 = arith.constant 0.000000e+00 : f32
    %14 = vector.broadcast %cst_2 : f32 to vector<2x384xf32>
    %cst_3 = arith.constant 0.000000e+00 : f32
    %15 = vector.broadcast %cst_3 : f32 to vector<2x384xf32>
    %c0_4 = arith.constant 0 : index
    %c0_5 = arith.constant 0 : index
    %c0_6 = arith.constant 0 : index
    %16 = vector.load %arg3[%c0_4, %c0_5, %c0_6] : memref<2x3x384xf32, #tpu.memory_space<vmem>>, vector<2x1x384xf32>
    %17 = vector.shape_cast %16 : vector<2x1x384xf32> to vector<2x384xf32>
    %c0_7 = arith.constant 0 : index
    %c0_8 = arith.constant 0 : index
    %c0_9 = arith.constant 0 : index
    %18 = vector.load %arg4[%c0_7, %c0_8, %c0_9] : memref<2x3x384xf32, #tpu.memory_space<vmem>>, vector<2x1x384xf32>
    %19 = vector.shape_cast %18 : vector<2x1x384xf32> to vector<2x384xf32>
    %20 = arith.subf %17, %19 : vector<2x384xf32>
    %21 = arith.mulf %20, %20 : vector<2x384xf32>
    %22 = arith.addf %14, %21 : vector<2x384xf32>
    %23 = arith.mulf %19, %19 : vector<2x384xf32>
    %24 = arith.addf %15, %23 : vector<2x384xf32>
    %c0_10 = arith.constant 0 : index
    %c1 = arith.constant 1 : index
    %c0_11 = arith.constant 0 : index
    %25 = vector.load %arg3[%c0_10, %c1, %c0_11] : memref<2x3x384xf32, #tpu.memory_space<vmem>>, vector<2x1x384xf32>
    %26 = vector.shape_cast %25 : vector<2x1x384xf32> to vector<2x384xf32>
    %c0_12 = arith.constant 0 : index
    %c1_13 = arith.constant 1 : index
    %c0_14 = arith.constant 0 : index
    %27 = vector.load %arg4[%c0_12, %c1_13, %c0_14] : memref<2x3x384xf32, #tpu.memory_space<vmem>>, vector<2x1x384xf32>
    %28 = vector.shape_cast %27 : vector<2x1x384xf32> to vector<2x384xf32>
    %29 = arith.subf %26, %28 : vector<2x384xf32>
    %30 = arith.mulf %29, %29 : vector<2x384xf32>
    %31 = arith.addf %22, %30 : vector<2x384xf32>
    %32 = arith.mulf %28, %28 : vector<2x384xf32>
    %33 = arith.addf %24, %32 : vector<2x384xf32>
    %c0_15 = arith.constant 0 : index
    %c2 = arith.constant 2 : index
    %c0_16 = arith.constant 0 : index
    %34 = vector.load %arg3[%c0_15, %c2, %c0_16] : memref<2x3x384xf32, #tpu.memory_space<vmem>>, vector<2x1x384xf32>
    %35 = vector.shape_cast %34 : vector<2x1x384xf32> to vector<2x384xf32>
    %c0_17 = arith.constant 0 : index
    %c2_18 = arith.constant 2 : index
    %c0_19 = arith.constant 0 : index
    %36 = vector.load %arg4[%c0_17, %c2_18, %c0_19] : memref<2x3x384xf32, #tpu.memory_space<vmem>>, vector<2x1x384xf32>
    %37 = vector.shape_cast %36 : vector<2x1x384xf32> to vector<2x384xf32>
    %38 = arith.subf %35, %37 : vector<2x384xf32>
    %39 = arith.mulf %38, %38 : vector<2x384xf32>
    %40 = arith.addf %31, %39 : vector<2x384xf32>
    %41 = arith.mulf %37, %37 : vector<2x384xf32>
    %42 = arith.addf %33, %41 : vector<2x384xf32>
    %cst_20 = arith.constant 9.99999968E-21 : f32
    %43 = vector.broadcast %cst_20 : f32 to vector<2x384xf32>
    %44 = arith.addf %40, %43 : vector<2x384xf32>
    %cst_21 = arith.constant 9.99999968E-21 : f32
    %45 = vector.broadcast %cst_21 : f32 to vector<2x384xf32>
    %46 = arith.addf %42, %45 : vector<2x384xf32>
    %cst_22 = arith.constant 1.000000e+00 : f32
    %47 = vector.broadcast %cst_22 : f32 to vector<2x384xf32>
    %48 = arith.maximumf %47, %46 : vector<2x384xf32>
    %cst_23 = arith.constant 2.500000e-03 : f32
    %49 = vector.broadcast %cst_23 : f32 to vector<2x384xf32>
    %50 = arith.mulf %49, %48 : vector<2x384xf32>
    %51 = arith.cmpf ole, %44, %50 : vector<2x384xf32>
    %cst_24 = arith.constant 0.000000e+00 : f32
    %52 = vector.broadcast %cst_24 : f32 to vector<2x384xf32>
    %53 = arith.cmpf one, %11, %52 : vector<2x384xf32>
    %54 = arith.andi %51, %53 : vector<2x384xi1>
    %55 = arith.andi %54, %10 : vector<2x384xi1>
    %c0_25 = arith.constant 0 : index
    %c0_26 = arith.constant 0 : index
    %c0_27 = arith.constant 0 : index
    %56 = vector.load %arg6[%c0_25, %c0_26, %c0_27] : memref<1x2x1xf32, #tpu.memory_space<vmem>>, vector<1x2x1xf32>
    %57 = vector.shape_cast %56 : vector<1x2x1xf32> to vector<2x1xf32>
    %58 = arith.extui %55 : vector<2x384xi1> to vector<2x384xi32>
    %59 = arith.sitofp %58 : vector<2x384xi32> to vector<2x384xf32>
    %cst_28 = arith.constant dense<0.000000e+00> : vector<2xf32>
    %60 = vector.multi_reduction <add>, %59, %cst_28 [1] : vector<2x384xf32> to vector<2xf32>
    %61 = vector.shape_cast %60 : vector<2xf32> to vector<2x1xf32>
    %62 = arith.addf %57, %61 : vector<2x1xf32>
    %c0_29 = arith.constant 0 : index
    %c0_30 = arith.constant 0 : index
    %c0_31 = arith.constant 0 : index
    %63 = vector.load %arg6[%c0_29, %c0_30, %c0_31] : memref<1x2x1xf32, #tpu.memory_space<vmem>>, vector<1x2x1xf32>
    %64 = vector.shape_cast %63 : vector<1x2x1xf32> to vector<2x1xf32>
    %65 = vector.shape_cast %62 : vector<2x1xf32> to vector<1x2x1xf32>
    tpu.vector_store %arg6[%c0_29, %c0_30, %c0_31], %65 {strides = array<i32>} : memref<1x2x1xf32, #tpu.memory_space<vmem>>, vector<1x2x1xf32>,
    %c0_32 = arith.constant 0 : index
    %c0_33 = arith.constant 0 : index
    %c0_34 = arith.constant 0 : index
    %66 = vector.load %arg7[%c0_32, %c0_33, %c0_34] : memref<1x2x1xf32, #tpu.memory_space<vmem>>, vector<1x2x1xf32>
    %67 = vector.shape_cast %66 : vector<1x2x1xf32> to vector<2x1xf32>
    %cst_35 = arith.constant dense<0.000000e+00> : vector<2xf32>
    %68 = vector.multi_reduction <add>, %13, %cst_35 [1] : vector<2x384xf32> to vector<2xf32>
    %69 = vector.shape_cast %68 : vector<2xf32> to vector<2x1xf32>
    %70 = arith.addf %67, %69 : vector<2x1xf32>
    %c0_36 = arith.constant 0 : index
    %c0_37 = arith.constant 0 : index
    %c0_38 = arith.constant 0 : index
    %71 = vector.load %arg7[%c0_36, %c0_37, %c0_38] : memref<1x2x1xf32, #tpu.memory_space<vmem>>, vector<1x2x1xf32>
    %72 = vector.shape_cast %71 : vector<1x2x1xf32> to vector<2x1xf32>
    %73 = vector.shape_cast %70 : vector<2x1xf32> to vector<1x2x1xf32>
    tpu.vector_store %arg7[%c0_36, %c0_37, %c0_38], %73 {strides = array<i32>} : memref<1x2x1xf32, #tpu.memory_space<vmem>>, vector<1x2x1xf32>,
    return
  }
  func.func @transform_0(%arg0: i32, %arg1: i32, %arg2: i32) -> (i32, i32, i32) {
    %c1_i32 = arith.constant 1 : i32
    %0 = arith.muli %arg0, %c1_i32 : i32
    %1 = arith.addi %0, %arg2 : i32
    %c0_i32 = arith.constant 0 : i32
    %2 = arith.minsi %1, %c0_i32 : i32
    %c0_i32_0 = arith.constant 0 : i32
    %c0_i32_1 = arith.constant 0 : i32
    return %arg1, %c0_i32_0, %2 : i32, i32, i32
  }
  func.func @transform_1(%arg0: i32, %arg1: i32, %arg2: i32) -> (i32, i32, i32) {
    %c1_i32 = arith.constant 1 : i32
    %0 = arith.muli %arg0, %c1_i32 : i32
    %1 = arith.addi %0, %arg2 : i32
    %c0_i32 = arith.constant 0 : i32
    %2 = arith.minsi %1, %c0_i32 : i32
    %c0_i32_0 = arith.constant 0 : i32
    %c0_i32_1 = arith.constant 0 : i32
    return %arg1, %c0_i32_0, %2 : i32, i32, i32
  }
  func.func @transform_2(%arg0: i32, %arg1: i32, %arg2: i32) -> (i32, i32) {
    %c1_i32 = arith.constant 1 : i32
    %0 = arith.muli %arg0, %c1_i32 : i32
    %1 = arith.addi %0, %arg2 : i32
    %c0_i32 = arith.constant 0 : i32
    %2 = arith.minsi %1, %c0_i32 : i32
    %c0_i32_0 = arith.constant 0 : i32
    return %arg1, %2 : i32, i32
  }
  func.func @transform_3(%arg0: i32, %arg1: i32, %arg2: i32) -> (i32, i32, i32) {
    %c0_i32 = arith.constant 0 : i32
    %c0_i32_0 = arith.constant 0 : i32
    return %arg0, %arg1, %c0_i32 : i32, i32, i32
  }
  func.func @transform_4(%arg0: i32, %arg1: i32, %arg2: i32) -> (i32, i32, i32) {
    %c0_i32 = arith.constant 0 : i32
    %c0_i32_0 = arith.constant 0 : i32
    return %arg0, %arg1, %c0_i32 : i32, i32, i32
  }
}

</mosaic_0001>

<llo_original>
// kernel: tpu_custom_call.1
$region0: #{tpu_custom_call.1}
  #allocation0 [shape = 'u32[]', space=smem, size = 0x4, offset = 0x4, fixed_abs, tag = 'smem constant byte address 0x4 - core index']
  #allocation1 [shape = 'u32[72,128]{1,0:T(1,128)}', space=vmem, size = 0x9000, scoped, tag = 'internal scratch']
  %s0 = inlined_call_operand.vmem [shape: f32[2,3,300], index: 0, kind: input, shape index: {}]
  %s1 = inlined_call_operand.vmem [shape: f32[2,3,300], index: 1, kind: input, shape index: {}]
  %s2 = inlined_call_operand.vmem [shape: f32[2,300], index: 2, kind: input, shape index: {}]
  %s3 = inlined_call_operand.vmem [shape: f32[1,2,1], index: 3, kind: output, shape index: {0}]
  %s4 = inlined_call_operand.vmem [shape: f32[1,2,1], index: 4, kind: output, shape index: {1}]
  %5 = xla_tuple %s3, %s4
  %s6 = sld [smem:[#allocation0]]
  $region34: #{tpu_custom_call.1} parent=0
    _
  %s8 = ssub.s32 1, %s6
  %s9 = scalar_select 0, %s8, %s6
  // Predicated region
  $region2: #{tpu_custom_call.1} parent=0 // pred_check
    _
  $region3: #{tpu_custom_call.1} parent=0 // pred_check_branch
    %11 = sbr.rel (0) target = $region5
  $region4: #{tpu_custom_call.1} parent=0 // pred_region
    %s12 = sadd.s32 0, 0
    %p13 = scmp.lt.s32.totalorder %s12, 0
    %s14 = scalar_select %p13, %s12, 0
    %s15 = smul.u32 3, %s14
    %p16 = scmp.lt.s32.totalorder %s15, 2
    %s17 = scalar_select %p16, %s15, 2
    %s18 = smul.addr %s17, 4
    %s19 = scalar_lea.vmem %s0, %s18
    %s20 = sadd.s32 0, 0
    %p21 = scmp.lt.s32.totalorder %s20, 0
    %s22 = scalar_select %p21, %s20, 0
    %s23 = smul.u32 3, %s22
  $region5: #{tpu_custom_call.1} parent=0 // pred_fallthru
    _
  // Predicated region
  $region6: #{tpu_custom_call.1} parent=0 // pred_check
    _
  $region7: #{tpu_custom_call.1} parent=0 // pred_check_branch
    %25 = sbr.rel (0) target = $region9
  $region8: #{tpu_custom_call.1} parent=0 // pred_region
    %s26 = sadd.s32 0, 0
    %p27 = scmp.lt.s32.totalorder %s26, 0
    %s28 = scalar_select %p27, %s26, 0
    %s29 = smul.u32 3, %s28
    %p30 = scmp.lt.s32.totalorder %s29, 2
    %s31 = scalar_select %p30, %s29, 2
    %s32 = smul.addr %s31, 4
    %s33 = scalar_lea.vmem %s1, %s32
    %s34 = sadd.s32 0, 0
    %p35 = scmp.lt.s32.totalorder %s34, 0
    %s36 = scalar_select %p35, %s34, 0
    %s37 = smul.u32 3, %s36
  $region9: #{tpu_custom_call.1} parent=0 // pred_fallthru
    _
  // Predicated region
  $region10: #{tpu_custom_call.1} parent=0 // pred_check
    _
  $region11: #{tpu_custom_call.1} parent=0 // pred_check_branch
    %39 = sbr.rel (0) target = $region13
  $region12: #{tpu_custom_call.1} parent=0 // pred_region
    %s40 = sadd.s32 0, 0
    %p41 = scmp.lt.s32.totalorder %s40, 0
    %s42 = scalar_select %p41, %s40, 0
    %s43 = smul.u32 3, %s42
    %p44 = scmp.lt.s32.totalorder %s43, 2
    %s45 = scalar_select %p44, %s43, 2
    %s46 = smul.addr %s45, 2
    %s47 = scalar_lea.vmem %s2, %s46
    %s48 = sadd.s32 0, 0
    %p49 = scmp.lt.s32.totalorder %s48, 0
    %s50 = scalar_select %p49, %s48, 0
    %s51 = smul.u32 3, %s50
  $region13: #{tpu_custom_call.1} parent=0 // pred_fallthru
    _
  %s52 = sadd.s32 0, 0
  %p53 = scmp.lt.s32.totalorder %s52, 0
  %s54 = scalar_select %p53, %s52, 0
  %s55 = smul.u32 3, %s54
  %p56 = scmp.lt.s32.totalorder %s55, 2
  %s57 = scalar_select %p56, %s55, 2
  %s58 = smul.addr %s57, 4
  %s59 = scalar_lea.vmem %s0, %s58
  %s60 = sadd.s32 0, 0
  %p61 = scmp.lt.s32.totalorder %s60, 0
  %s62 = scalar_select %p61, %s60, 0
  %s63 = smul.u32 3, %s62
  %p64 = scmp.lt.s32.totalorder %s63, 2
  %s65 = scalar_select %p64, %s63, 2
  %s66 = smul.addr %s65, 4
  %s67 = scalar_lea.vmem %s1, %s66
  %s68 = sadd.s32 0, 0
  %p69 = scmp.lt.s32.totalorder %s68, 0
  %s70 = scalar_select %p69, %s68, 0
  %s71 = smul.u32 3, %s70
  %p72 = scmp.lt.s32.totalorder %s71, 2
  %s73 = scalar_select %p72, %s71, 2
  %s74 = smul.addr %s73, 2
  %s75 = scalar_lea.vmem %s2, %s74
  %s76 = sadd.s32 0, 0
  %p77 = scmp.lt.s32.totalorder %s76, 0
  %s78 = scalar_select %p77, %s76, 0
  %s79 = smul.u32 3, %s78
  %p80 = scmp.lt.s32.totalorder %s79, 2
  %s81 = scalar_select %p80, %s79, 2
  %s82 = smul.addr %s81, 4
  %s83 = scalar_lea.vmem %s0, %s82
  %s84 = sadd.s32 0, 0
  %p85 = scmp.lt.s32.totalorder %s84, 0
  %s86 = scalar_select %p85, %s84, 0
  %s87 = smul.u32 3, %s86
  %s88 = sadd.s32 0, 0
  %p89 = scmp.lt.s32.totalorder %s88, 0
  %s90 = scalar_select %p89, %s88, 0
  %s91 = smul.u32 3, %s90
  %p92 = scmp.lt.s32.totalorder %s91, 2
  %s93 = scalar_select %p92, %s91, 2
  %s94 = smul.addr %s93, 4
  %s95 = scalar_lea.vmem %s1, %s94
  %s96 = sadd.s32 0, 0
  %p97 = scmp.lt.s32.totalorder %s96, 0
  %s98 = scalar_select %p97, %s96, 0
  %s99 = smul.u32 3, %s98
  %s100 = sadd.s32 0, 0
  %p101 = scmp.lt.s32.totalorder %s100, 0
  %s102 = scalar_select %p101, %s100, 0
  %s103 = smul.u32 3, %s102
  %p104 = scmp.lt.s32.totalorder %s103, 2
  %s105 = scalar_select %p104, %s103, 2
  %s106 = smul.addr %s105, 2
  %s107 = scalar_lea.vmem %s2, %s106
  %s108 = sadd.s32 0, 0
  %p109 = scmp.lt.s32.totalorder %s108, 0
  %s110 = scalar_select %p109, %s108, 0
  %s111 = smul.u32 3, %s110
  %p112 = scmp.eq.s32.totalorder 0, 0
  // Predicated region
  $region14: #{tpu_custom_call.1} parent=0 // pred_check
    %p113 = pneg %p112
  $region15: #{tpu_custom_call.1} parent=0 // pred_check_branch
    %115 = sbr.rel (%p113) target = $region17
  $region16: #{tpu_custom_call.1} parent=0 // pred_region
    %vm116 = vcmask 1024
    %117 = vst.msk [vmem:[%s3] sm:$0x3] %vm116, 0.0
    %118 = vst.msk [vmem:[%s4] sm:$0x3] %vm116, 0.0
  $region17: #{tpu_custom_call.1} parent=0 // pred_fallthru
    _
  %s119 = sadd.s32 0, 0
  %s120 = smul.u32 %s119, 384
  %v121 = vlaneseq
  %v122 = vand.u32 %v121, 127
  %v123 = vadd.s32 %v122, 128
  %v124 = vadd.s32 %v122, 256
  %v125 = vstv %s120
  %v126 = vadd.s32 %v125, %v122
  %v127 = vadd.s32 %v125, %v123
  %v128 = vadd.s32 %v125, %v124
  %vm129 = vcmp.lt.s32.totalorder %v126, 300
  %vm130 = vcmp.lt.s32.totalorder %v127, 300
  %vm131 = vcmp.lt.s32.totalorder %v128, 300
  %v132 = vld [vmem:[%s107] sm:$0x3f]
  %134 = vst [vmem:[#allocation1] ss:$4 sm:$0xff] %v132
  %v135 = vld.sshfl [vmem:[#allocation1] sm:$0xff pattern:$0x73625140]
  %v136 = vld.sshfl [vmem:[#allocation1 + $0x8] sm:$0xff pattern:$0x73625140]
  %v137 = vld.sshfl [vmem:[#allocation1 + $0x10] sm:$0xff pattern:$0x73625140]
  %v141 = vsel %vm129, %v135, 0.0
  %v142 = vsel %vm130, %v136, 0.0
  %v143 = vsel %vm131, %v137, 0.0
  %v144 = vld [vmem:[%s83] ss:$4 sm:$0x7]
  %s145 = scalar_lea.vmem %s83, 12
  %v146 = vld [vmem:[%s145] ss:$4 sm:$0x7]
  %v147 = vld [vmem:[%s95] ss:$4 sm:$0x7]
  %s148 = scalar_lea.vmem %s95, 12
  %v149 = vld [vmem:[%s148] ss:$4 sm:$0x7]
  %v150 = vsub.f32 %v144, %v147
  %v151 = vsub.f32 %v146, %v149
  %v152 = vmul.f32 %v150, %v150
  %v153 = vmul.f32 %v151, %v151
  %v154 = vadd.f32 %v152, 0.0
  %v155 = vadd.f32 %v153, 0.0
  %v156 = vmul.f32 %v147, %v147
  %v157 = vmul.f32 %v149, %v149
  %v158 = vadd.f32 %v156, 0.0
  %v159 = vadd.f32 %v157, 0.0
  %s160 = scalar_lea.vmem %s83, 1
  %v161 = vld [vmem:[%s160] ss:$4 sm:$0x7]
  %s162 = scalar_lea.vmem %s83, 13
  %v163 = vld [vmem:[%s162] ss:$4 sm:$0x7]
  %s164 = scalar_lea.vmem %s95, 1
  %v165 = vld [vmem:[%s164] ss:$4 sm:$0x7]
  %s166 = scalar_lea.vmem %s95, 13
  %v167 = vld [vmem:[%s166] ss:$4 sm:$0x7]
  %v168 = vsub.f32 %v161, %v165
  %v169 = vsub.f32 %v163, %v167
  %v170 = vmul.f32 %v168, %v168
  %v171 = vmul.f32 %v169, %v169
  %v172 = vadd.f32 %v154, %v170
  %v173 = vadd.f32 %v155, %v171
  %v174 = vmul.f32 %v165, %v165
  %v175 = vmul.f32 %v167, %v167
  %v176 = vadd.f32 %v158, %v174
  %v177 = vadd.f32 %v159, %v175
  %s178 = scalar_lea.vmem %s83, 2
  %v179 = vld [vmem:[%s178] ss:$4 sm:$0x7]
  %s180 = scalar_lea.vmem %s83, 14
  %v181 = vld [vmem:[%s180] ss:$4 sm:$0x7]
  %s182 = scalar_lea.vmem %s95, 2
  %v183 = vld [vmem:[%s182] ss:$4 sm:$0x7]
  %s184 = scalar_lea.vmem %s95, 14
  %v185 = vld [vmem:[%s184] ss:$4 sm:$0x7]
  %v186 = vsub.f32 %v179, %v183
  %v187 = vsub.f32 %v181, %v185
  %v188 = vmul.f32 %v186, %v186
  %v189 = vmul.f32 %v187, %v187
  %v190 = vadd.f32 %v172, %v188
  %v191 = vadd.f32 %v173, %v189
  %v192 = vmul.f32 %v183, %v183
  %v193 = vmul.f32 %v185, %v185
  %v194 = vadd.f32 %v176, %v192
  %v195 = vadd.f32 %v177, %v193
  %v196 = vadd.f32 %v190, 1e-20
  %v197 = vadd.f32 %v191, 1e-20
  %v198 = vadd.f32 %v194, 1e-20
  %v199 = vadd.f32 %v195, 1e-20
  %v200 = vmax.f32 %v198, 1.0
  %v201 = vmax.f32 %v199, 1.0
  %v202 = vmul.f32 %v200, 0.0025
  %v203 = vmul.f32 %v201, 0.0025
  %vm204 = vcmp.le.f32.partialorder %v196, %v202
  %vm205 = vcmp.le.f32.partialorder %v197, %v203
  %vm206 = vcmp.ne.f32.partialorder %v132, 0.0
  %v207 = vsel %vm206, 1, 0
  %v208 = vrot.slane %v207, 1
  %v209 = vrot.slane %v207, 2
  %v210 = vrot.slane %v207, 3
  %vm211 = vcmask 1040384
  %v212 = vsel %vm211, %v207, %v208
  %vm213 = vcmask 1042434
  %v214 = vsel %vm213, %v209, %v210
  %vm215 = vcmask 1041408
  %v216 = vsel %vm215, %v212, %v214
  %vm217 = vcmask 1041409
  %v218 = vsel %vm217, %v207, %v208
  %vm219 = vcmask 1043459
  %v220 = vsel %vm219, %v209, %v210
  %vm221 = vcmask 1042433
  %v222 = vsel %vm221, %v218, %v220
  %v223 = vrot.slane %v222, 1
  %vm224 = vcmp.ne.s32.totalorder %v216, 0
  %vm225 = vcmp.ne.s32.totalorder %v223, 0
  %vm226 = vmand %vm204, %vm224
  %vm227 = vmand %vm205, %vm225
  %v228 = vsel %vm129, 1, 0
  %v229 = vsel %vm130, 1, 0
  %v230 = vsel %vm131, 1, 0
  %v231 = vrot.slane %v229, 7
  %v232 = vrot.slane %v230, 6
  %v233 = vsel %vm211, %v228, %v231
  %v234 = vsel %vm215, %v233, %v232
  %v235 = vsel %vm217, %v228, %v231
  %v236 = vsel %vm221, %v235, %v232
  %v237 = vrot.slane %v236, 1
  %vm238 = vcmp.ne.s32.totalorder %v234, 0
  %vm239 = vcmp.ne.s32.totalorder %v237, 0
  %vm240 = vmand %vm226, %vm238
  %vm241 = vmand %vm227, %vm239
  %v242 = vld [vmem:[%s3] sm:$0x3]
  %v243 = vsel %vm240, 1, 0
  %v244 = vsel %vm241, 1, 0
  %v245 = vcvt.s32.f32 %v243
  %v246 = vcvt.s32.f32 %v244
  %249 = vst [vmem:[#allocation1] ss:$9 sm:$0xff] %v245
  %s250 = scalar_lea.vmem [#allocation1], 1
  %251 = vst [vmem:[%s250] ss:$9 sm:$0xff] %v246
  %v252 = vld [vmem:[#allocation1] sm:$0xff]
  %v253 = vld [vmem:[#allocation1 + $0x9] sm:$0xff]
  %v254 = vld [vmem:[#allocation1 + $0x12] sm:$0xff]
  %v258 = vsel %vm215, %v252, 0.0
  %v259 = vsel %vm215, %v253, 0.0
  %v260 = vadd.f32 %v258, %v259
  %v261 = vsel %vm215, %v254, 0.0
  %v262 = vadd.f32 %v260, %v261
  %263 = vadd.xlane.f32.xlu0 %v262
  %v264 = vpop.xlane.xlu0 %263
  %v265 = vadd.f32 %v242, %v264
  %vm266 = vcmask 1024
  %267 = vst.msk [vmem:[%s3] sm:$0x3] %vm266, %v265
  %v268 = vld [vmem:[%s4] sm:$0x3]
  %v269 = vsel %vm215, %v141, 0.0
  %v270 = vsel %vm215, %v142, 0.0
  %v271 = vadd.f32 %v269, %v270
  %v272 = vsel %vm215, %v143, 0.0
  %v273 = vadd.f32 %v271, %v272
  %274 = vadd.xlane.f32.xlu0 %v273
  %v275 = vpop.xlane.xlu0 %274
  %v276 = vadd.f32 %v268, %v275
  %277 = vst.msk [vmem:[%s4] sm:$0x3] %vm266, %v276
  // Predicated region
  $region18: #{tpu_custom_call.1} parent=0 // pred_check
    _
  $region19: #{tpu_custom_call.1} parent=0 // pred_check_branch
    %279 = sbr.rel (0) target = $region21
  $region20: #{tpu_custom_call.1} parent=0 // pred_region
    _
  $region21: #{tpu_custom_call.1} parent=0 // pred_fallthru
    _
  // Predicated region
  $region22: #{tpu_custom_call.1} parent=0 // pred_check
    _
  $region23: #{tpu_custom_call.1} parent=0 // pred_check_branch
    %281 = sbr.rel (0) target = $region25
  $region24: #{tpu_custom_call.1} parent=0 // pred_region
    _
  $region25: #{tpu_custom_call.1} parent=0 // pred_fallthru
    _
  // Predicated region
  $region26: #{tpu_custom_call.1} parent=0 // pred_check
    _
  $region27: #{tpu_custom_call.1} parent=0 // pred_check_branch
    %283 = sbr.rel (0) target = $region29
  $region28: #{tpu_custom_call.1} parent=0 // pred_region
    _
  $region29: #{tpu_custom_call.1} parent=0 // pred_fallthru
    _
  // Predicated region
  $region30: #{tpu_custom_call.1} parent=0 // pred_check
    _
  $region31: #{tpu_custom_call.1} parent=0 // pred_check_branch
    %285 = sbr.rel (0) target = $region33
  $region32: #{tpu_custom_call.1} parent=0 // pred_region
    _
  $region33: #{tpu_custom_call.1} parent=0 // pred_fallthru
    _

</llo_original>
